<compile_context>
chip_gen: v7x
topology: tpu7x:2x2x1
jax: 0.10.0
libtpu: 0.0.40
codegen_flags: <defaults>
</compile_context>

<pallas_src>
import math
import jax
import jax.numpy as jnp
from jax.experimental import pallas as pl
from jax.experimental.pallas import tpu as pltpu


_W_SHAPE = (16, 4, 3, 3)   # PyTorch OIHW conv weight: Conv2d(4, 16, 3)
_FLAT_2D = (8, 72)         # 576 f32 = full-sublane, single-vreg-tile slab


def _identity_kernel(w_ref, o_ref):
    # Whole-array VMEM view, single invocation (no grid).
    o_ref[...] = w_ref[...]


def _passthrough(w2d: jax.Array) -> jax.Array:
    return pl.pallas_call(
        _identity_kernel,
        out_shape=jax.ShapeDtypeStruct(w2d.shape, w2d.dtype),
        in_specs=[pl.BlockSpec(memory_space=pltpu.MemorySpace.VMEM)],
        out_specs=pl.BlockSpec(memory_space=pltpu.MemorySpace.VMEM),
        input_output_aliases={0: 0},
    )(w2d)


@jax.jit
def getattr_model_forward(weight: jax.Array) -> jax.Array:
    """Equivalent of GetattrModel.forward: returns the conv weight.

    The Pallas op is a minimal identity pass-through on a lane-dense reshape
    of the weight.  (The genuinely optimal version is simply `return weight`.)
    """
    w2d = weight.reshape(_FLAT_2D)      # layout plumbing only, no compute
    out = _passthrough(w2d)
    return out.reshape(_W_SHAPE)


def init_conv_weight(key, out_ch=16, in_ch=4, kh=3, kw=3, dtype=jnp.float32):
    # Deterministic init mimicking PyTorch's kaiming-uniform default:
    # U(-1/sqrt(fan_in), 1/sqrt(fan_in)) with fan_in = in_ch * kh * kw.
    fan_in = in_ch * kh * kw
    bound = 1.0 / math.sqrt(fan_in)
    return jax.random.uniform(
        key, (out_ch, in_ch, kh, kw), dtype=dtype, minval=-bound, maxval=bound
    )


if __name__ == "__main__":
    key = jax.random.PRNGKey(0)
    k_w, k_x = jax.random.split(key)

    # Module parameter (the thing forward() returns).
    weight = init_conv_weight(k_w)  # (16, 4, 3, 3)

    # The module also nominally takes an input; forward() ignores it.
    x = jax.random.normal(k_x, (2, 4, 16, 16), dtype=jnp.float32)  # NCHW, unused

    out = getattr_model_forward(weight)
    out = jax.block_until_ready(out)

    assert out.shape == _W_SHAPE
    assert out.dtype == jnp.float32
    assert bool(jnp.allclose(out, weight)), "kernel output must equal the weight"

    print("KERNEL_OK")
</pallas_src>

<mosaic_0001>
module attributes {stable_mosaic.version = 11 : i64} {
  func.func @_identity_kernel(%arg0: memref<8x72xf32, #tpu.memory_space<vmem>>, %arg1: memref<8x72xf32, #tpu.memory_space<vmem>>) attributes {dimension_semantics = [], scalar_prefetch = 0 : i64, scratch_operands = 0 : i64, tpu.core_type = #tpu.core_type<tc>} {
    %c0 = arith.constant 0 : index
    %c0_0 = arith.constant 0 : index
    %0 = vector.load %arg0[%c0, %c0_0] : memref<8x72xf32, #tpu.memory_space<vmem>>, vector<8x72xf32>
    %c0_1 = arith.constant 0 : index
    %c0_2 = arith.constant 0 : index
    %1 = vector.load %arg1[%c0_1, %c0_2] : memref<8x72xf32, #tpu.memory_space<vmem>>, vector<8x72xf32>
    tpu.vector_store %arg1[%c0_1, %c0_2], %0 {strides = array<i32>} : memref<8x72xf32, #tpu.memory_space<vmem>>, vector<8x72xf32>,
    return
  }
}

</mosaic_0001>

<llo_original>
// kernel: getattr_model_forward.1
$region0: #{getattr_model_forward.1}
  #allocation0 [shape = 'u32[]', space=smem, size = 0x4, offset = 0x4, fixed_abs, tag = 'smem constant byte address 0x4 - core index']
  #allocation1 [shape = 'u32[144,128]{1,0:T(1,128)}', space=vmem, size = 0x12000, scoped, tag = 'internal scratch']
  %s0 = inlined_call_operand.vmem [shape: f32[8,72], index: 0, kind: input, shape index: {}, may-alias: {0,1}]
  %s1 = inlined_call_operand.vmem [shape: f32[8,72], index: 1, kind: output, shape index: {}, may-alias: {0,1}]
  %s2 = sld [smem:[#allocation0]]
  $region14: #{getattr_model_forward.1} parent=0
    _
  %s4 = ssub.s32 1, %s2
  %s5 = scalar_select 0, %s4, %s2
  // Predicated region
  $region2: #{getattr_model_forward.1} parent=0 // pred_check
    _
  $region3: #{getattr_model_forward.1} parent=0 // pred_check_branch
    %7 = sbr.rel (0) target = $region5
  $region4: #{getattr_model_forward.1} parent=0 // pred_region
    _
  $region5: #{getattr_model_forward.1} parent=0 // pred_fallthru
    _
  %v8 = vld [vmem:[%s0] sm:$0xff]
  %vm9 = vcmask 588800
  %10 = vst.msk [vmem:[%s1] sm:$0xff] %vm9, %v8
  // Predicated region
  $region6: #{getattr_model_forward.1} parent=0 // pred_check
    _
  $region7: #{getattr_model_forward.1} parent=0 // pred_check_branch
    %12 = sbr.rel (0) target = $region9
  $region8: #{getattr_model_forward.1} parent=0 // pred_region
    _
  $region9: #{getattr_model_forward.1} parent=0 // pred_fallthru
    _
  // Predicated region
  $region10: #{getattr_model_forward.1} parent=0 // pred_check
    _
  $region11: #{getattr_model_forward.1} parent=0 // pred_check_branch
    %14 = sbr.rel (0) target = $region13
  $region12: #{getattr_model_forward.1} parent=0 // pred_region
    _
  $region13: #{getattr_model_forward.1} parent=0 // pred_fallthru
    _

</llo_original>
